<compile_context>
chip_gen: v5e
topology: v5e:2x2
jax: 0.10.0
libtpu: 0.0.40
codegen_flags: <defaults>
</compile_context>

<pallas_src>
import functools

import jax
import jax.numpy as jnp
from jax import lax
from jax.experimental import pallas as pl
from jax.experimental.pallas import tpu as pltpu


def sdpa_kernel(*refs, scale, with_mask):
    if with_mask:
        q_ref, k_ref, v_ref, m_ref, attn_ref, out_ref = refs
    else:
        q_ref, k_ref, v_ref, attn_ref, out_ref = refs
        m_ref = None

    q = q_ref[...].astype(jnp.float32)          # (block_q, Dk)
    k = k_ref[...].astype(jnp.float32)          # (Lk, Dk)
    v = v_ref[...].astype(jnp.float32)          # (Lk, Dv)

    # scores: q @ k^T / scale — contract on the feature axis, no transpose copy.
    u = lax.dot_general(q, k, (((1,), (1,)), ((), ())),
                        preferred_element_type=jnp.float32)
    u = u * (1.0 / scale)

    if with_mask:
        u = jnp.where(m_ref[...] > 0.0, -jnp.inf, u)

    # numerically stable softmax over the key axis (torch nn.Softmax(dim=1) on 2-D scores)
    u_max = jnp.max(u, axis=1, keepdims=True)
    e = jnp.exp(u - u_max)
    denom = jnp.sum(e, axis=1, keepdims=True)
    inv = pl.reciprocal(denom, approx=True)     # EUP slot (otherwise idle)
    inv = inv * (2.0 - denom * inv)             # one Newton step -> full f32 accuracy
    attn = e * inv

    attn_ref[...] = attn.astype(attn_ref.dtype)
    out = jnp.dot(attn, v, preferred_element_type=jnp.float32)
    out_ref[...] = out.astype(out_ref.dtype)


def scaled_dot_product_attention(q, k, v, scale, mask=None, *, block_q=128):
    """q: (Lq, Dk), k: (Lk, Dk), v: (Lk, Dv); mask (optional): bool (Lq, Lk).

    Returns (attn (Lq, Lk), output (Lq, Dv)) exactly like the PyTorch module.
    """
    Lq, Dk = q.shape
    Lk, Dk2 = k.shape
    Lk2, Dv = v.shape
    assert Dk == Dk2 and Lk == Lk2

    num_q_tiles = pl.cdiv(Lq, block_q)
    Lq_pad = num_q_tiles * block_q
    if Lq_pad != Lq:                         # pad query rows, slice results back
        q = jnp.pad(q, ((0, Lq_pad - Lq), (0, 0)))

    mask_f = None
    if mask is not None:
        mask_f = mask.astype(jnp.float32)    # avoid bool layouts in VMEM
        if Lq_pad != Lq:
            mask_f = jnp.pad(mask_f, ((0, Lq_pad - Lq), (0, 0)))

    in_specs = [
        pl.BlockSpec((block_q, Dk), lambda i: (i, 0)),   # q tile
        pl.BlockSpec((Lk, Dk), lambda i: (0, 0)),        # full K, resident
        pl.BlockSpec((Lk, Dv), lambda i: (0, 0)),        # full V, resident
    ]
    args = [q, k, v]
    if mask_f is not None:
        in_specs.append(pl.BlockSpec((block_q, Lk), lambda i: (i, 0)))
        args.append(mask_f)

    kernel = functools.partial(sdpa_kernel, scale=float(scale),
                               with_mask=mask_f is not None)

    attn, out = pl.pallas_call(
        kernel,
        out_shape=(
            jax.ShapeDtypeStruct((Lq_pad, Lk), q.dtype),
            jax.ShapeDtypeStruct((Lq_pad, Dv), q.dtype),
        ),
        grid_spec=pltpu.PrefetchScalarGridSpec(
            num_scalar_prefetch=0,
            grid=(num_q_tiles,),
            in_specs=in_specs,
            out_specs=[
                pl.BlockSpec((block_q, Lk), lambda i: (i, 0)),  # lane-dense (Lk % 128 == 0)
                pl.BlockSpec((block_q, Dv), lambda i: (i, 0)),
            ],
        ),
        compiler_params=pltpu.CompilerParams(
            dimension_semantics=("parallel",),
        ),
    )(*args)

    return attn[:Lq], out[:Lq]


def sdpa_reference(q, k, v, scale, mask=None):
    # pure-JAX reference mirroring the PyTorch forward
    u = (q @ k.T) / scale
    if mask is not None:
        u = jnp.where(mask, -jnp.inf, u)
    attn = jax.nn.softmax(u, axis=1)         # nn.Softmax(dim=1) on 2-D scores
    return attn, attn @ v


if __name__ == "__main__":
    key = jax.random.PRNGKey(0)
    kq, kk, kv, km = jax.random.split(key, 4)

    Lq, Lk, Dk, Dv = 200, 128, 64, 64        # Lq deliberately NOT a tile multiple
    scale = float(Dk) ** 0.5

    q = jax.random.normal(kq, (Lq, Dk), dtype=jnp.float32)
    k = jax.random.normal(kk, (Lk, Dk), dtype=jnp.float32)
    v = jax.random.normal(kv, (Lk, Dv), dtype=jnp.float32)

    # --- mask=None path ---
    attn, out = scaled_dot_product_attention(q, k, v, scale)
    attn = jax.block_until_ready(attn)
    out = jax.block_until_ready(out)
    attn_r, out_r = sdpa_reference(q, k, v, scale)
    assert attn.shape == (Lq, Lk) and out.shape == (Lq, Dv)
    assert jnp.allclose(attn, attn_r, atol=1e-3, rtol=1e-3)
    assert jnp.allclose(out, out_r, atol=1e-3, rtol=1e-3)

    # --- masked path (no query row fully masked -> no NaNs, same as torch) ---
    mask = jax.random.uniform(km, (Lq, Lk)) > 0.8
    mask = mask.at[:, 0].set(False)
    attn_m, out_m = scaled_dot_product_attention(q, k, v, scale, mask=mask)
    attn_m = jax.block_until_ready(attn_m)
    out_m = jax.block_until_ready(out_m)
    attn_mr, out_mr = sdpa_reference(q, k, v, scale, mask=mask)
    assert jnp.allclose(attn_m, attn_mr, atol=1e-3, rtol=1e-3)
    assert jnp.allclose(out_m, out_mr, atol=1e-3, rtol=1e-3)

    print("KERNEL_OK")
</pallas_src>

<mosaic_0001>
module attributes {stable_mosaic.version = 11 : i64} {
  func.func @sdpa_kernel(%arg0: i32, %arg1: memref<128x64xf32, #tpu.memory_space<vmem>>, %arg2: memref<128x64xf32, #tpu.memory_space<vmem>>, %arg3: memref<128x64xf32, #tpu.memory_space<vmem>>, %arg4: memref<128x128xf32, #tpu.memory_space<vmem>>, %arg5: memref<128x64xf32, #tpu.memory_space<vmem>>) attributes {dimension_semantics = [#tpu.dimension_semantics<parallel>], iteration_bounds = array<i64: 2>, scalar_prefetch = 0 : i64, scratch_operands = 0 : i64, tpu.core_type = #tpu.core_type<tc>, window_params = [{transform_indices = @transform_0, window_bounds = array<i64: 128, 64>}, {pipeline_mode = #tpu.pipeline_mode<synchronous>, transform_indices = @transform_1, window_bounds = array<i64: 128, 64>}, {pipeline_mode = #tpu.pipeline_mode<synchronous>, transform_indices = @transform_2, window_bounds = array<i64: 128, 64>}, {transform_indices = @transform_3, window_bounds = array<i64: 128, 128>}, {transform_indices = @transform_4, window_bounds = array<i64: 128, 64>}]} {
    %c0 = arith.constant 0 : index
    %c0_0 = arith.constant 0 : index
    %0 = vector.load %arg1[%c0, %c0_0] : memref<128x64xf32, #tpu.memory_space<vmem>>, vector<128x64xf32>
    %c0_1 = arith.constant 0 : index
    %c0_2 = arith.constant 0 : index
    %1 = vector.load %arg2[%c0_1, %c0_2] : memref<128x64xf32, #tpu.memory_space<vmem>>, vector<128x64xf32>
    %c0_3 = arith.constant 0 : index
    %c0_4 = arith.constant 0 : index
    %2 = vector.load %arg3[%c0_3, %c0_4] : memref<128x64xf32, #tpu.memory_space<vmem>>, vector<128x64xf32>
    %cst = arith.constant dense<0.000000e+00> : vector<128x128xf32>
    %3 = tpu.matmul %0, %1, %cst {dimension_numbers = #tpu.dot_dimension_numbers<[1], [1], [0], [0], [0, 0, 1, 0], [], []>} : vector<128x64xf32>, vector<128x64xf32>, vector<128x128xf32> -> vector<128x128xf32>
    %cst_5 = arith.constant 1.250000e-01 : f32
    %4 = vector.broadcast %cst_5 : f32 to vector<128x128xf32>
    %5 = arith.mulf %3, %4 : vector<128x128xf32>
    %cst_6 = arith.constant dense<0xFF800000> : vector<128xf32>
    %6 = vector.multi_reduction <maximumf>, %5, %cst_6 [1] : vector<128x128xf32> to vector<128xf32>
    %7 = vector.shape_cast %6 : vector<128xf32> to vector<128x1xf32>
    %8 = vector.broadcast %7 : vector<128x1xf32> to vector<128x128xf32>
    %9 = arith.subf %5, %8 : vector<128x128xf32>
    %10 = math.exp %9 : vector<128x128xf32>
    %cst_7 = arith.constant dense<0.000000e+00> : vector<128xf32>
    %11 = vector.multi_reduction <add>, %10, %cst_7 [1] : vector<128x128xf32> to vector<128xf32>
    %12 = vector.shape_cast %11 : vector<128xf32> to vector<128x1xf32>
    %13 = tpu.reciprocal %12 {approx = true} : vector<128x1xf32> -> vector<128x1xf32>
    %14 = arith.mulf %12, %13 : vector<128x1xf32>
    %cst_8 = arith.constant 2.000000e+00 : f32
    %15 = vector.broadcast %cst_8 : f32 to vector<128x1xf32>
    %16 = arith.subf %15, %14 : vector<128x1xf32>
    %17 = arith.mulf %13, %16 : vector<128x1xf32>
    %18 = vector.broadcast %17 : vector<128x1xf32> to vector<128x128xf32>
    %19 = arith.mulf %10, %18 : vector<128x128xf32>
    %c0_9 = arith.constant 0 : index
    %c0_10 = arith.constant 0 : index
    %20 = vector.load %arg4[%c0_9, %c0_10] : memref<128x128xf32, #tpu.memory_space<vmem>>, vector<128x128xf32>
    tpu.vector_store %arg4[%c0_9, %c0_10], %19 {strides = array<i32>} : memref<128x128xf32, #tpu.memory_space<vmem>>, vector<128x128xf32>,
    %cst_11 = arith.constant dense<0.000000e+00> : vector<128x64xf32>
    %21 = tpu.matmul %19, %2, %cst_11 {dimension_numbers = #tpu.dot_dimension_numbers<[1], [0], [0], [1], [0, 0, 1, 1], [], []>} : vector<128x128xf32>, vector<128x64xf32>, vector<128x64xf32> -> vector<128x64xf32>
    %c0_12 = arith.constant 0 : index
    %c0_13 = arith.constant 0 : index
    %22 = vector.load %arg5[%c0_12, %c0_13] : memref<128x64xf32, #tpu.memory_space<vmem>>, vector<128x64xf32>
    tpu.vector_store %arg5[%c0_12, %c0_13], %21 {strides = array<i32>} : memref<128x64xf32, #tpu.memory_space<vmem>>, vector<128x64xf32>,
    return
  }
  func.func @transform_0(%arg0: i32) -> (i32, i32) {
    %c0_i32 = arith.constant 0 : i32
    %c0_i32_0 = arith.constant 0 : i32
    return %arg0, %c0_i32 : i32, i32
  }
  func.func @transform_1(%arg0: i32) -> (i32, i32) {
    %c0_i32 = arith.constant 0 : i32
    %c0_i32_0 = arith.constant 0 : i32
    %c0_i32_1 = arith.constant 0 : i32
    return %c0_i32, %c0_i32_0 : i32, i32
  }
  func.func @transform_2(%arg0: i32) -> (i32, i32) {
    %c0_i32 = arith.constant 0 : i32
    %c0_i32_0 = arith.constant 0 : i32
    %c0_i32_1 = arith.constant 0 : i32
    return %c0_i32, %c0_i32_0 : i32, i32
  }
  func.func @transform_3(%arg0: i32) -> (i32, i32) {
    %c0_i32 = arith.constant 0 : i32
    %c0_i32_0 = arith.constant 0 : i32
    return %arg0, %c0_i32 : i32, i32
  }
  func.func @transform_4(%arg0: i32) -> (i32, i32) {
    %c0_i32 = arith.constant 0 : i32
    %c0_i32_0 = arith.constant 0 : i32
    return %arg0, %c0_i32 : i32, i32
  }
}

</mosaic_0001>

<llo_original>
// kernel: tpu_custom_call.1
$region0: #{tpu_custom_call.1}
  #allocation0 [shape = 'u32[]', space=smem, size = 0x4, offset = 0x4, fixed_abs, tag = 'smem constant byte address 0x4 - core index']
  #allocation1 [shape = 'u32[72,128]{1,0:T(1,128)}', space=vmem, size = 0x9000, scoped, tag = 'internal scratch']
  %s0 = inlined_call_operand.vmem [shape: f32[256,64], index: 0, kind: input, shape index: {}]
  %s1 = inlined_call_operand.vmem [shape: f32[128,64], index: 1, kind: input, shape index: {}]
  %s2 = inlined_call_operand.vmem [shape: f32[128,64], index: 2, kind: input, shape index: {}]
  %s3 = inlined_call_operand.hbm [shape: f32[256,128], index: 3, kind: output, shape index: {0}]
  %s4 = inlined_call_operand.vmem [shape: f32[256,64], index: 4, kind: output, shape index: {1}]
  %5 = xla_tuple %s3, %s4
  %s6 = sld [smem:[#allocation0]]
  $region53: #{tpu_custom_call.1} parent=0
    _
  %s8 = ssub.s32 1, %s6
  %s9 = scalar_select 0, %s8, %s6
  $region1: #{tpu_custom_call.1} parent=0
    #allocation2 [shape = 'u8[131072]{0}', space=vmem, size = 0x20000, scoped, tag = 'output window, operand 0']
    #allocation3 [shape = 's32[2]{0}', space=sflag, size = 0x8, scoped, tag = 'scoped memory for tpu_custom_call.1']
    %10 = vsyncpa [#allocation3], 0
    %s11 = scalar_lea.sflag [#allocation3], 1
    %12 = vsyncpa %s11, 0
    loop: start=0, step=1, limit=4
    $region2: #{tpu_custom_call.1} parent=1 // loop_pre_header
      _
    $region3: #{tpu_custom_call.1} parent=1 // loop_header
      %s14 = sphi 0, %s18
      %p15 = scmp.ge.s32.totalorder %s14, 4
      %s24 = sphi 0, %s26
      %s27 = sphi 0, %s24
      %s28 = sphi 0, %s27
      %s44 = sphi 0, %s28
      %s48 = sphi 0, %s48
      %s50 = sphi 0, %s48
      %s51 = sphi 0, %s50
      %s65 = sphi 0, %s51
      %s69 = sphi 0, %s69
      %s71 = sphi 0, %s69
      %s72 = sphi 0, %s71
      %s86 = sphi 0, %s72
      %s92 = sphi 0, %s94
      %s95 = sphi 0, %s92
      %s96 = sphi 0, %s95
      %s112 = sphi 0, %s96
      %s118 = sphi 0, %s120
      %s121 = sphi 0, %s118
      %s122 = sphi 0, %s121
      %s138 = sphi 0, %s122
    $region4: #{tpu_custom_call.1} parent=1 // loop_header_branch
      %17 = sbr.rel (%p15) target = $region8
    $region5: #{tpu_custom_call.1} parent=1 // loop_body
      %s19 = ssub.s32 %s14, 1
      %s20 = ssub.s32 %s14, 2
      %s21 = sadd.s32 %s14, 1
      %s22 = ssub.s32 %s14, %s21
      %p23 = scmp.eq.s32.totalorder %s22, 0
      %s25 = sadd.s32 %s24, 1
      %s26 = scalar_select %p23, %s24, %s25
      %p29 = pneg %p23
      %p30 = scmp.eq.s32.totalorder %s14, 1
      %p31 = por %p29, %p30
      %p32 = scmp.ne.s32.totalorder %s24, %s27
      %p33 = scmp.eq.s32.totalorder %s14, 0
      %p34 = por %p32, %p33
      %p35 = scmp.ne.s32.totalorder %s24, %s27
      %p36 = scmp.eq.s32.totalorder %s19, 1
      %p37 = por %p35, %p36
      %p38 = scmp.ne.s32.totalorder %s27, %s28
      %p39 = scmp.eq.s32.totalorder %s19, 0
      %p40 = por %p38, %p39
      %p41 = scmp.ne.s32.totalorder %s27, %s28
      %p42 = scmp.eq.s32.totalorder %s20, 1
      %p43 = por %p41, %p42
      %p45 = scmp.ne.s32.totalorder %s28, %s44
      %p46 = scmp.eq.s32.totalorder %s20, 0
      %p47 = por %p45, %p46
      %s49 = sadd.s32 %s48, 1
      %p52 = scmp.eq.s32.totalorder %s14, 1
      %p53 = scmp.ne.s32.totalorder %s48, %s50
      %p54 = scmp.eq.s32.totalorder %s14, 0
      %p55 = por %p53, %p54
      %p56 = scmp.ne.s32.totalorder %s48, %s50
      %p57 = scmp.eq.s32.totalorder %s19, 1
      %p58 = por %p56, %p57
      %p59 = scmp.ne.s32.totalorder %s50, %s51
      %p60 = scmp.eq.s32.totalorder %s19, 0
      %p61 = por %p59, %p60
      %p62 = scmp.ne.s32.totalorder %s50, %s51
      %p63 = scmp.eq.s32.totalorder %s20, 1
      %p64 = por %p62, %p63
      %p66 = scmp.ne.s32.totalorder %s51, %s65
      %p67 = scmp.eq.s32.totalorder %s20, 0
      %p68 = por %p66, %p67
      %s70 = sadd.s32 %s69, 1
      %p73 = scmp.eq.s32.totalorder %s14, 1
      %p74 = scmp.ne.s32.totalorder %s69, %s71
      %p75 = scmp.eq.s32.totalorder %s14, 0
      %p76 = por %p74, %p75
      %p77 = scmp.ne.s32.totalorder %s69, %s71
      %p78 = scmp.eq.s32.totalorder %s19, 1
      %p79 = por %p77, %p78
      %p80 = scmp.ne.s32.totalorder %s71, %s72
      %p81 = scmp.eq.s32.totalorder %s19, 0
      %p82 = por %p80, %p81
      %p83 = scmp.ne.s32.totalorder %s71, %s72
      %p84 = scmp.eq.s32.totalorder %s20, 1
      %p85 = por %p83, %p84
      %p87 = scmp.ne.s32.totalorder %s72, %s86
      %p88 = scmp.eq.s32.totalorder %s20, 0
      %p89 = por %p87, %p88
      %s90 = ssub.s32 %s14, %s21
      %p91 = scmp.eq.s32.totalorder %s90, 0
      %s93 = sadd.s32 %s92, 1
      %s94 = scalar_select %p91, %s92, %s93
      %p97 = pneg %p91
      %p98 = scmp.eq.s32.totalorder %s14, 1
      %p99 = por %p97, %p98
      %p100 = scmp.ne.s32.totalorder %s92, %s95
      %p101 = scmp.eq.s32.totalorder %s14, 0
      %p102 = por %p100, %p101
      %p103 = scmp.ne.s32.totalorder %s92, %s95
      %p104 = scmp.eq.s32.totalorder %s19, 1
      %p105 = por %p103, %p104
      %p106 = scmp.ne.s32.totalorder %s95, %s96
      %p107 = scmp.eq.s32.totalorder %s19, 0
      %p108 = por %p106, %p107
      %p109 = scmp.ne.s32.totalorder %s95, %s96
      %p110 = scmp.eq.s32.totalorder %s20, 1
      %p111 = por %p109, %p110
      %p113 = scmp.ne.s32.totalorder %s96, %s112
      %p114 = scmp.eq.s32.totalorder %s20, 0
      %p115 = por %p113, %p114
      %s116 = ssub.s32 %s14, %s21
      %p117 = scmp.eq.s32.totalorder %s116, 0
      %s119 = sadd.s32 %s118, 1
      %s120 = scalar_select %p117, %s118, %s119
      %p123 = pneg %p117
      %p124 = scmp.eq.s32.totalorder %s14, 1
      %p125 = por %p123, %p124
      %p126 = scmp.ne.s32.totalorder %s118, %s121
      %p127 = scmp.eq.s32.totalorder %s14, 0
      %p128 = por %p126, %p127
      %p129 = scmp.ne.s32.totalorder %s118, %s121
      %p130 = scmp.eq.s32.totalorder %s19, 1
      %p131 = por %p129, %p130
      %p132 = scmp.ne.s32.totalorder %s121, %s122
      %p133 = scmp.eq.s32.totalorder %s19, 0
      %p134 = por %p132, %p133
      %p135 = scmp.ne.s32.totalorder %s121, %s122
      %p136 = scmp.eq.s32.totalorder %s20, 1
      %p137 = por %p135, %p136
      %p139 = scmp.ne.s32.totalorder %s122, %s138
      %p140 = scmp.eq.s32.totalorder %s20, 0
      %p141 = por %p139, %p140
      %p142 = scmp.le.s32.totalorder 1, %s14
      %p143 = scmp.lt.s32.totalorder %s14, 3
      %p144 = pnand %p142, %p143
      %p145 = pneg %p144
      // Predicated region
      $region9: #{tpu_custom_call.1} parent=5 // pred_check
        _
      $region10: #{tpu_custom_call.1} parent=5 // pred_check_branch
        %147 = sbr.rel (%p144) target = $region12
      $region11: #{tpu_custom_call.1} parent=5 // pred_region
        %s148 = ssub.s32 %s14, 1
        // Predicated region
        $region13: #{tpu_custom_call.1} parent=11 // pred_check
          %p149 = pneg %p61
        $region14: #{tpu_custom_call.1} parent=11 // pred_check_branch
          %151 = sbr.rel (%p149) target = $region16
        $region15: #{tpu_custom_call.1} parent=11 // pred_region
          _
        $region16: #{tpu_custom_call.1} parent=11 // pred_fallthru
          _
        // Predicated region
        $region17: #{tpu_custom_call.1} parent=11 // pred_check
          %p152 = pneg %p82
        $region18: #{tpu_custom_call.1} parent=11 // pred_check_branch
          %154 = sbr.rel (%p152) target = $region20
        $region19: #{tpu_custom_call.1} parent=11 // pred_region
          _
        $region20: #{tpu_custom_call.1} parent=11 // pred_fallthru
          _
      $region12: #{tpu_custom_call.1} parent=5 // pred_fallthru
        _
      %p155 = scmp.lt.s32.totalorder %s14, 2
      // Predicated region
      $region21: #{tpu_custom_call.1} parent=5 // pred_check
        %p156 = pneg %p155
      $region22: #{tpu_custom_call.1} parent=5 // pred_check_branch
        %158 = sbr.rel (%p156) target = $region24
      $region23: #{tpu_custom_call.1} parent=5 // pred_region
        // Predicated region
        $region25: #{tpu_custom_call.1} parent=23 // pred_check
          %p159 = pneg %p34
        $region26: #{tpu_custom_call.1} parent=23 // pred_check_branch
          %161 = sbr.rel (%p159) target = $region28
        $region27: #{tpu_custom_call.1} parent=23 // pred_region
          %s162 = smul.u32 16, %s14
          %p163 = scmp.lt.s32.totalorder %s162, 31
          %s164 = scalar_select %p163, %s162, 31
          %s165 = smul.addr %s164, 8
          %s166 = scalar_lea.vmem %s0, %s165
          %s167 = smul.u32 16, %s14
        $region28: #{tpu_custom_call.1} parent=23 // pred_fallthru
          _
      $region24: #{tpu_custom_call.1} parent=5 // pred_fallthru
        _
      %p168 = scmp.le.s32.totalorder 1, %s14
      %p169 = scmp.lt.s32.totalorder %s14, 3
      %p170 = pnand %p168, %p169
      %p171 = pneg %p170
      // Predicated region
      $region29: #{tpu_custom_call.1} parent=5 // pred_check
        _
      $region30: #{tpu_custom_call.1} parent=5 // pred_check_branch
        %173 = sbr.rel (%p170) target = $region32
      $region31: #{tpu_custom_call.1} parent=5 // pred_region
        %s174 = ssub.s32 %s14, 1
        %s175 = smul.u32 16, %s19
        %p176 = scmp.lt.s32.totalorder %s175, 31
        %s177 = scalar_select %p176, %s175, 31
        %s178 = smul.addr %s177, 8
        %s179 = scalar_lea.vmem %s0, %s178
        %p180 = pneg %p40
        %p181 = pneg %p37
        %p182 = pneg %p61
        %p183 = pneg %p58
        %p184 = pneg %p82
        %p185 = pneg %p79
        %p186 = pneg %p108
        %p187 = pneg %p105
        %s188 = sand.u32 %s95, 1
        %s189 = scalar_lea.sflag [#allocation3], %s188
        %s190 = sand.u32 %s95, 1
        %s191 = smul.addr %s190, 128
        %s192 = scalar_lea.vmem [#allocation2], %s191
        %p193 = pneg %p134
        %p194 = pneg %p131
        %s195 = smul.u32 16, %s19
        %p196 = scmp.lt.s32.totalorder %s195, 31
        %s197 = scalar_select %p196, %s195, 31
        %s198 = smul.addr %s197, 8
        %s199 = scalar_lea.vmem %s4, %s198
        %s200 = smul.u32 16, %s19
        %p201 = scmp.lt.s32.totalorder %s200, 31
        %s202 = scalar_select %p201, %s200, 31
        %s203 = smul.addr %s202, 8
        %s204 = scalar_lea.vmem %s0, %s203
        %s205 = smul.u32 16, %s19
        %s206 = smul.u32 16, %s19
        %s207 = smul.u32 16, %s19
        %p208 = scmp.lt.s32.totalorder %s207, 31
        %s209 = scalar_select %p208, %s207, 31
        %s210 = smul.addr %s209, 8
        %s211 = scalar_lea.vmem %s4, %s210
        %s212 = smul.u32 16, %s19
        %v213 = vld [vmem:[%s204] sm:$0xff]
        %v214 = vld [vmem:[%s204 + $0x8] sm:$0xff]
        %v215 = vld [vmem:[%s204 + $0x10] sm:$0xff]
        %v216 = vld [vmem:[%s204 + $0x18] sm:$0xff]
        %v217 = vld [vmem:[%s204 + $0x20] sm:$0xff]
        %v218 = vld [vmem:[%s204 + $0x28] sm:$0xff]
        %v219 = vld [vmem:[%s204 + $0x30] sm:$0xff]
        %v220 = vld [vmem:[%s204 + $0x38] sm:$0xff]
        %v221 = vld [vmem:[%s204 + $0x40] sm:$0xff]
        %v222 = vld [vmem:[%s204 + $0x48] sm:$0xff]
        %v223 = vld [vmem:[%s204 + $0x50] sm:$0xff]
        %v224 = vld [vmem:[%s204 + $0x58] sm:$0xff]
        %v225 = vld [vmem:[%s204 + $0x60] sm:$0xff]
        %v226 = vld [vmem:[%s204 + $0x68] sm:$0xff]
        %v227 = vld [vmem:[%s204 + $0x70] sm:$0xff]
        %v228 = vld [vmem:[%s204 + $0x78] sm:$0xff]
        %v229 = vld [vmem:[%s1] sm:$0xff]
        %v230 = vld [vmem:[%s1 + $0x8] sm:$0xff]
        %v231 = vld [vmem:[%s1 + $0x10] sm:$0xff]
        %v232 = vld [vmem:[%s1 + $0x18] sm:$0xff]
        %v233 = vld [vmem:[%s1 + $0x20] sm:$0xff]
        %v234 = vld [vmem:[%s1 + $0x28] sm:$0xff]
        %v235 = vld [vmem:[%s1 + $0x30] sm:$0xff]
        %v236 = vld [vmem:[%s1 + $0x38] sm:$0xff]
        %v237 = vld [vmem:[%s1 + $0x40] sm:$0xff]
        %v238 = vld [vmem:[%s1 + $0x48] sm:$0xff]
        %v239 = vld [vmem:[%s1 + $0x50] sm:$0xff]
        %v240 = vld [vmem:[%s1 + $0x58] sm:$0xff]
        %v241 = vld [vmem:[%s1 + $0x60] sm:$0xff]
        %v242 = vld [vmem:[%s1 + $0x68] sm:$0xff]
        %v243 = vld [vmem:[%s1 + $0x70] sm:$0xff]
        %v244 = vld [vmem:[%s1 + $0x78] sm:$0xff]
        %v245 = vld [vmem:[%s2] sm:$0xff]
        %v246 = vld [vmem:[%s2 + $0x8] sm:$0xff]
        %v247 = vld [vmem:[%s2 + $0x10] sm:$0xff]
        %v248 = vld [vmem:[%s2 + $0x18] sm:$0xff]
        %v249 = vld [vmem:[%s2 + $0x20] sm:$0xff]
        %v250 = vld [vmem:[%s2 + $0x28] sm:$0xff]
        %v251 = vld [vmem:[%s2 + $0x30] sm:$0xff]
        %v252 = vld [vmem:[%s2 + $0x38] sm:$0xff]
        %v253 = vld [vmem:[%s2 + $0x40] sm:$0xff]
        %v254 = vld [vmem:[%s2 + $0x48] sm:$0xff]
        %v255 = vld [vmem:[%s2 + $0x50] sm:$0xff]
        %v256 = vld [vmem:[%s2 + $0x58] sm:$0xff]
        %v257 = vld [vmem:[%s2 + $0x60] sm:$0xff]
        %v258 = vld [vmem:[%s2 + $0x68] sm:$0xff]
        %v259 = vld [vmem:[%s2 + $0x70] sm:$0xff]
        %v260 = vld [vmem:[%s2 + $0x78] sm:$0xff]
        %vm261 = vcmask 523264
        %v263 = vsel %vm261, %v213, 0
        %v266 = vsel %vm261, %v214, 0
        %v269 = vsel %vm261, %v215, 0
        %v272 = vsel %vm261, %v216, 0
        %v275 = vsel %vm261, %v217, 0
        %v278 = vsel %vm261, %v218, 0
        %v281 = vsel %vm261, %v219, 0
        %v284 = vsel %vm261, %v220, 0
        %v287 = vsel %vm261, %v221, 0
        %v290 = vsel %vm261, %v222, 0
        %v293 = vsel %vm261, %v223, 0
        %v296 = vsel %vm261, %v224, 0
        %v299 = vsel %vm261, %v225, 0
        %v302 = vsel %vm261, %v226, 0
        %v305 = vsel %vm261, %v227, 0
        %v308 = vsel %vm261, %v228, 0
        %v311 = vsel %vm261, %v229, 0
        %v314 = vsel %vm261, %v230, 0
        %v317 = vsel %vm261, %v231, 0
        %v320 = vsel %vm261, %v232, 0
        %v323 = vsel %vm261, %v233, 0
        %v326 = vsel %vm261, %v234, 0
        %v329 = vsel %vm261, %v235, 0
        %v332 = vsel %vm261, %v236, 0
        %v335 = vsel %vm261, %v237, 0
        %v338 = vsel %vm261, %v238, 0
        %v341 = vsel %vm261, %v239, 0
        %v344 = vsel %vm261, %v240, 0
        %v347 = vsel %vm261, %v241, 0
        %v350 = vsel %vm261, %v242, 0
        %v353 = vsel %vm261, %v243, 0
        %v356 = vsel %vm261, %v244, 0
        %358 = vmatpush.xpose.msra.mxu0 %v356
        %359 = vmatpush.xpose.msra.mxu0 %v353
        %360 = vmatpush.xpose.msra.mxu0 %v350
        %361 = vmatpush.xpose.msra.mxu0 %v347
        %362 = vmatpush.xpose.msra.mxu0 %v344
        %363 = vmatpush.xpose.msra.mxu0 %v341
        %364 = vmatpush.xpose.msra.mxu0 %v338
        %365 = vmatpush.xpose.msra.mxu0 %v335
        %366 = vmatpush.xpose.msra.mxu0 %v332
        %367 = vmatpush.xpose.msra.mxu0 %v329
        %368 = vmatpush.xpose.msra.mxu0 %v326
        %369 = vmatpush.xpose.msra.mxu0 %v323
        %370 = vmatpush.xpose.msra.mxu0 %v320
        %371 = vmatpush.xpose.msra.mxu0 %v317
        %372 = vmatpush.xpose.msra.mxu0 %v314
        %373 = vmatpush.xpose.msra.mxu0 %v311
        %374 = vmatmul.f32.gmra.mxu0 %v263
        %v375 = vpop.f32.mrf.mxu0
        %v376 = vadd.f32 0.0, %v375
        %377 = vmatmul.f32.gmra.mxu0 %v266
        %v378 = vpop.f32.mrf.mxu0
        %v379 = vadd.f32 0.0, %v378
        %380 = vmatmul.f32.gmra.mxu0 %v269
        %v381 = vpop.f32.mrf.mxu0
        %v382 = vadd.f32 0.0, %v381
        %383 = vmatmul.f32.gmra.mxu0 %v272
        %v384 = vpop.f32.mrf.mxu0
        %v385 = vadd.f32 0.0, %v384
        %386 = vmatmul.f32.gmra.mxu0 %v275
        %v387 = vpop.f32.mrf.mxu0
        %v388 = vadd.f32 0.0, %v387
        %389 = vmatmul.f32.gmra.mxu0 %v278
        %v390 = vpop.f32.mrf.mxu0
        %v391 = vadd.f32 0.0, %v390
        %392 = vmatmul.f32.gmra.mxu0 %v281
        %v393 = vpop.f32.mrf.mxu0
        %v394 = vadd.f32 0.0, %v393
        %395 = vmatmul.f32.gmra.mxu0 %v284
        %v396 = vpop.f32.mrf.mxu0
        %v397 = vadd.f32 0.0, %v396
        %398 = vmatmul.f32.gmra.mxu0 %v287
        %v399 = vpop.f32.mrf.mxu0
        %v400 = vadd.f32 0.0, %v399
        %401 = vmatmul.f32.gmra.mxu0 %v290
        %v402 = vpop.f32.mrf.mxu0
        %v403 = vadd.f32 0.0, %v402
        %404 = vmatmul.f32.gmra.mxu0 %v293
        %v405 = vpop.f32.mrf.mxu0
        %v406 = vadd.f32 0.0, %v405
        %407 = vmatmul.f32.gmra.mxu0 %v296
        %v408 = vpop.f32.mrf.mxu0
        %v409 = vadd.f32 0.0, %v408
        %410 = vmatmul.f32.gmra.mxu0 %v299
        %v411 = vpop.f32.mrf.mxu0
        %v412 = vadd.f32 0.0, %v411
        %413 = vmatmul.f32.gmra.mxu0 %v302
        %v414 = vpop.f32.mrf.mxu0
        %v415 = vadd.f32 0.0, %v414
        %416 = vmatmul.f32.gmra.mxu0 %v305
        %v417 = vpop.f32.mrf.mxu0
        %v418 = vadd.f32 0.0, %v417
        %419 = vmatmul.f32.gmra.mxu0 %v308
        %v420 = vpop.f32.mrf.mxu0
        %v421 = vadd.f32 0.0, %v420
        %422 = vdwg.mxu0
        %v423 = vmul.f32 %v376, 0.125
        %v424 = vmul.f32 %v379, 0.125
        %v425 = vmul.f32 %v382, 0.125
        %v426 = vmul.f32 %v385, 0.125
        %v427 = vmul.f32 %v388, 0.125
        %v428 = vmul.f32 %v391, 0.125
        %v429 = vmul.f32 %v394, 0.125
        %v430 = vmul.f32 %v397, 0.125
        %v431 = vmul.f32 %v400, 0.125
        %v432 = vmul.f32 %v403, 0.125
        %v433 = vmul.f32 %v406, 0.125
        %v434 = vmul.f32 %v409, 0.125
        %v435 = vmul.f32 %v412, 0.125
        %v436 = vmul.f32 %v415, 0.125
        %v437 = vmul.f32 %v418, 0.125
        %v438 = vmul.f32 %v421, 0.125
        %439 = vmax.xlane.f32.xlu0 %v423
        %v440 = vpop.xlane.xlu0 %439
        %441 = vmax.xlane.f32.xlu0 %v424
        %v442 = vpop.xlane.xlu0 %441
        %443 = vmax.xlane.f32.xlu0 %v425
        %v444 = vpop.xlane.xlu0 %443
        %445 = vmax.xlane.f32.xlu0 %v426
        %v446 = vpop.xlane.xlu0 %445
        %447 = vmax.xlane.f32.xlu0 %v427
        %v448 = vpop.xlane.xlu0 %447
        %449 = vmax.xlane.f32.xlu0 %v428
        %v450 = vpop.xlane.xlu0 %449
        %451 = vmax.xlane.f32.xlu0 %v429
        %v452 = vpop.xlane.xlu0 %451
        %453 = vmax.xlane.f32.xlu0 %v430
        %v454 = vpop.xlane.xlu0 %453
        %455 = vmax.xlane.f32.xlu0 %v431
        %v456 = vpop.xlane.xlu0 %455
        %457 = vmax.xlane.f32.xlu0 %v432
        %v458 = vpop.xlane.xlu0 %457
        %459 = vmax.xlane.f32.xlu0 %v433
        %v460 = vpop.xlane.xlu0 %459
        %461 = vmax.xlane.f32.xlu0 %v434
        %v462 = vpop.xlane.xlu0 %461
        %463 = vmax.xlane.f32.xlu0 %v435
        %v464 = vpop.xlane.xlu0 %463
        %465 = vmax.xlane.f32.xlu0 %v436
        %v466 = vpop.xlane.xlu0 %465
        %467 = vmax.xlane.f32.xlu0 %v437
        %v468 = vpop.xlane.xlu0 %467
        %469 = vmax.xlane.f32.xlu0 %v438
        %v470 = vpop.xlane.xlu0 %469
        %v471 = vsub.f32 %v423, %v440
        %v472 = vsub.f32 %v424, %v442
        %v473 = vsub.f32 %v425, %v444
        %v474 = vsub.f32 %v426, %v446
        %v475 = vsub.f32 %v427, %v448
        %v476 = vsub.f32 %v428, %v450
        %v477 = vsub.f32 %v429, %v452
        %v478 = vsub.f32 %v430, %v454
        %v479 = vsub.f32 %v431, %v456
        %v480 = vsub.f32 %v432, %v458
        %v481 = vsub.f32 %v433, %v460
        %v482 = vsub.f32 %v434, %v462
        %v483 = vsub.f32 %v435, %v464
        %v484 = vsub.f32 %v436, %v466
        %v485 = vsub.f32 %v437, %v468
        %v486 = vsub.f32 %v438, %v470
        %v487 = vmul.f32 %v471, 1.442695
        %v488 = vpow.pop %v487
        %v489 = vmul.f32 %v472, 1.442695
        %v490 = vpow.pop %v489
        %v491 = vmul.f32 %v473, 1.442695
        %v492 = vpow.pop %v491
        %v493 = vmul.f32 %v474, 1.442695
        %v494 = vpow.pop %v493
        %v495 = vmul.f32 %v475, 1.442695
        %v496 = vpow.pop %v495
        %v497 = vmul.f32 %v476, 1.442695
        %v498 = vpow.pop %v497
        %v499 = vmul.f32 %v477, 1.442695
        %v500 = vpow.pop %v499
        %v501 = vmul.f32 %v478, 1.442695
        %v502 = vpow.pop %v501
        %v503 = vmul.f32 %v479, 1.442695
        %v504 = vpow.pop %v503
        %v505 = vmul.f32 %v480, 1.442695
        %v506 = vpow.pop %v505
        %v507 = vmul.f32 %v481, 1.442695
        %v508 = vpow.pop %v507
        %v509 = vmul.f32 %v482, 1.442695
        %v510 = vpow.pop %v509
        %v511 = vmul.f32 %v483, 1.442695
        %v512 = vpow.pop %v511
        %v513 = vmul.f32 %v484, 1.442695
        %v514 = vpow.pop %v513
        %v515 = vmul.f32 %v485, 1.442695
        %v516 = vpow.pop %v515
        %v517 = vmul.f32 %v486, 1.442695
        %v518 = vpow.pop %v517
        %519 = vadd.xlane.f32.xlu0 %v488
        %v520 = vpop.xlane.xlu0 %519
        %521 = vadd.xlane.f32.xlu0 %v490
        %v522 = vpop.xlane.xlu0 %521
        %523 = vadd.xlane.f32.xlu0 %v492
        %v524 = vpop.xlane.xlu0 %523
        %525 = vadd.xlane.f32.xlu0 %v494
        %v526 = vpop.xlane.xlu0 %525
        %527 = vadd.xlane.f32.xlu0 %v496
        %v528 = vpop.xlane.xlu0 %527
        %529 = vadd.xlane.f32.xlu0 %v498
        %v530 = vpop.xlane.xlu0 %529
        %531 = vadd.xlane.f32.xlu0 %v500
        %v532 = vpop.xlane.xlu0 %531
        %533 = vadd.xlane.f32.xlu0 %v502
        %v534 = vpop.xlane.xlu0 %533
        %535 = vadd.xlane.f32.xlu0 %v504
        %v536 = vpop.xlane.xlu0 %535
        %537 = vadd.xlane.f32.xlu0 %v506
        %v538 = vpop.xlane.xlu0 %537
        %539 = vadd.xlane.f32.xlu0 %v508
        %v540 = vpop.xlane.xlu0 %539
        %541 = vadd.xlane.f32.xlu0 %v510
        %v542 = vpop.xlane.xlu0 %541
        %543 = vadd.xlane.f32.xlu0 %v512
        %v544 = vpop.xlane.xlu0 %543
        %545 = vadd.xlane.f32.xlu0 %v514
        %v546 = vpop.xlane.xlu0 %545
        %547 = vadd.xlane.f32.xlu0 %v516
        %v548 = vpop.xlane.xlu0 %547
        %549 = vadd.xlane.f32.xlu0 %v518
        %v550 = vpop.xlane.xlu0 %549
        %v551 = vrcp.pop %v520
        %v552 = vrcp.pop %v522
        %v553 = vrcp.pop %v524
        %v554 = vrcp.pop %v526
        %v555 = vrcp.pop %v528
        %v556 = vrcp.pop %v530
        %v557 = vrcp.pop %v532
        %v558 = vrcp.pop %v534
        %v559 = vrcp.pop %v536
        %v560 = vrcp.pop %v538
        %v561 = vrcp.pop %v540
        %v562 = vrcp.pop %v542
        %v563 = vrcp.pop %v544
        %v564 = vrcp.pop %v546
        %v565 = vrcp.pop %v548
        %v566 = vrcp.pop %v550
        %v567 = vmul.f32 %v520, %v551
        %v568 = vmul.f32 %v522, %v552
        %v569 = vmul.f32 %v524, %v553
        %v570 = vmul.f32 %v526, %v554
        %v571 = vmul.f32 %v528, %v555
        %v572 = vmul.f32 %v530, %v556
        %v573 = vmul.f32 %v532, %v557
        %v574 = vmul.f32 %v534, %v558
        %v575 = vmul.f32 %v536, %v559
        %v576 = vmul.f32 %v538, %v560
        %v577 = vmul.f32 %v540, %v561
        %v578 = vmul.f32 %v542, %v562
        %v579 = vmul.f32 %v544, %v563
        %v580 = vmul.f32 %v546, %v564
        %v581 = vmul.f32 %v548, %v565
        %v582 = vmul.f32 %v550, %v566
        %v583 = vsub.f32 2.0, %v567
        %v584 = vsub.f32 2.0, %v568
        %v585 = vsub.f32 2.0, %v569
        %v586 = vsub.f32 2.0, %v570
        %v587 = vsub.f32 2.0, %v571
        %v588 = vsub.f32 2.0, %v572
        %v589 = vsub.f32 2.0, %v573
        %v590 = vsub.f32 2.0, %v574
        %v591 = vsub.f32 2.0, %v575
        %v592 = vsub.f32 2.0, %v576
        %v593 = vsub.f32 2.0, %v577
        %v594 = vsub.f32 2.0, %v578
        %v595 = vsub.f32 2.0, %v579
        %v596 = vsub.f32 2.0, %v580
        %v597 = vsub.f32 2.0, %v581
        %v598 = vsub.f32 2.0, %v582
        %v599 = vmul.f32 %v551, %v583
        %v600 = vmul.f32 %v552, %v584
        %v601 = vmul.f32 %v553, %v585
        %v602 = vmul.f32 %v554, %v586
        %v603 = vmul.f32 %v555, %v587
        %v604 = vmul.f32 %v556, %v588
        %v605 = vmul.f32 %v557, %v589
        %v606 = vmul.f32 %v558, %v590
        %v607 = vmul.f32 %v559, %v591
        %v608 = vmul.f32 %v560, %v592
        %v609 = vmul.f32 %v561, %v593
        %v610 = vmul.f32 %v562, %v594
        %v611 = vmul.f32 %v563, %v595
        %v612 = vmul.f32 %v564, %v596
        %v613 = vmul.f32 %v565, %v597
        %v614 = vmul.f32 %v566, %v598
        %v615 = vmul.f32 %v488, %v599
        %v616 = vmul.f32 %v490, %v600
        %v617 = vmul.f32 %v492, %v601
        %v618 = vmul.f32 %v494, %v602
        %v619 = vmul.f32 %v496, %v603
        %v620 = vmul.f32 %v498, %v604
        %v621 = vmul.f32 %v500, %v605
        %v622 = vmul.f32 %v502, %v606
        %v623 = vmul.f32 %v504, %v607
        %v624 = vmul.f32 %v506, %v608
        %v625 = vmul.f32 %v508, %v609
        %v626 = vmul.f32 %v510, %v610
        %v627 = vmul.f32 %v512, %v611
        %v628 = vmul.f32 %v514, %v612
        %v629 = vmul.f32 %v516, %v613
        %v630 = vmul.f32 %v518, %v614
        %631 = vst [vmem:[%s192] sm:$0xff] %v615
        %632 = vst [vmem:[%s192 + $0x8] sm:$0xff] %v616
        %633 = vst [vmem:[%s192 + $0x10] sm:$0xff] %v617
        %634 = vst [vmem:[%s192 + $0x18] sm:$0xff] %v618
        %635 = vst [vmem:[%s192 + $0x20] sm:$0xff] %v619
        %636 = vst [vmem:[%s192 + $0x28] sm:$0xff] %v620
        %637 = vst [vmem:[%s192 + $0x30] sm:$0xff] %v621
        %638 = vst [vmem:[%s192 + $0x38] sm:$0xff] %v622
        %639 = vst [vmem:[%s192 + $0x40] sm:$0xff] %v623
        %640 = vst [vmem:[%s192 + $0x48] sm:$0xff] %v624
        %641 = vst [vmem:[%s192 + $0x50] sm:$0xff] %v625
        %642 = vst [vmem:[%s192 + $0x58] sm:$0xff] %v626
        %643 = vst [vmem:[%s192 + $0x60] sm:$0xff] %v627
        %644 = vst [vmem:[%s192 + $0x68] sm:$0xff] %v628
        %645 = vst [vmem:[%s192 + $0x70] sm:$0xff] %v629
        %646 = vst [vmem:[%s192 + $0x78] sm:$0xff] %v630
        %647 = vmatpush.msra.mxu0 %v260
        %648 = vmatpush.msra.mxu0 %v259
        %649 = vmatpush.msra.mxu0 %v258
        %650 = vmatpush.msra.mxu0 %v257
        %651 = vmatpush.msra.mxu0 %v256
        %652 = vmatpush.msra.mxu0 %v255
        %653 = vmatpush.msra.mxu0 %v254
        %654 = vmatpush.msra.mxu0 %v253
        %655 = vmatpush.msra.mxu0 %v252
        %656 = vmatpush.msra.mxu0 %v251
        %657 = vmatpush.msra.mxu0 %v250
        %658 = vmatpush.msra.mxu0 %v249
        %659 = vmatpush.msra.mxu0 %v248
        %660 = vmatpush.msra.mxu0 %v247
        %661 = vmatpush.msra.mxu0 %v246
        %662 = vmatpush.msra.mxu0 %v245
        %663 = vmatmul.f32.gmra.mxu0 %v615
        %v664 = vpop.f32.mrf.mxu0
        %v665 = vadd.f32 0.0, %v664
        %666 = vmatmul.f32.gmra.mxu0 %v616
        %v667 = vpop.f32.mrf.mxu0
        %v668 = vadd.f32 0.0, %v667
        %669 = vmatmul.f32.gmra.mxu0 %v617
        %v670 = vpop.f32.mrf.mxu0
        %v671 = vadd.f32 0.0, %v670
        %672 = vmatmul.f32.gmra.mxu0 %v618
        %v673 = vpop.f32.mrf.mxu0
        %v674 = vadd.f32 0.0, %v673
        %675 = vmatmul.f32.gmra.mxu0 %v619
        %v676 = vpop.f32.mrf.mxu0
        %v677 = vadd.f32 0.0, %v676
        %678 = vmatmul.f32.gmra.mxu0 %v620
        %v679 = vpop.f32.mrf.mxu0
        %v680 = vadd.f32 0.0, %v679
        %681 = vmatmul.f32.gmra.mxu0 %v621
        %v682 = vpop.f32.mrf.mxu0
        %v683 = vadd.f32 0.0, %v682
        %684 = vmatmul.f32.gmra.mxu0 %v622
        %v685 = vpop.f32.mrf.mxu0
        %v686 = vadd.f32 0.0, %v685
        %687 = vmatmul.f32.gmra.mxu0 %v623
        %v688 = vpop.f32.mrf.mxu0
        %v689 = vadd.f32 0.0, %v688
        %690 = vmatmul.f32.gmra.mxu0 %v624
        %v691 = vpop.f32.mrf.mxu0
        %v692 = vadd.f32 0.0, %v691
        %693 = vmatmul.f32.gmra.mxu0 %v625
        %v694 = vpop.f32.mrf.mxu0
        %v695 = vadd.f32 0.0, %v694
        %696 = vmatmul.f32.gmra.mxu0 %v626
        %v697 = vpop.f32.mrf.mxu0
        %v698 = vadd.f32 0.0, %v697
        %699 = vmatmul.f32.gmra.mxu0 %v627
        %v700 = vpop.f32.mrf.mxu0
        %v701 = vadd.f32 0.0, %v700
        %702 = vmatmul.f32.gmra.mxu0 %v628
        %v703 = vpop.f32.mrf.mxu0
        %v704 = vadd.f32 0.0, %v703
        %705 = vmatmul.f32.gmra.mxu0 %v629
        %v706 = vpop.f32.mrf.mxu0
        %v707 = vadd.f32 0.0, %v706
        %708 = vmatmul.f32.gmra.mxu0 %v630
        %v709 = vpop.f32.mrf.mxu0
        %v710 = vadd.f32 0.0, %v709
        %711 = vdwg.mxu0
        %712 = vst.msk [vmem:[%s211] sm:$0xff] %vm261, %v665
        %713 = vst.msk [vmem:[%s211 + $0x8] sm:$0xff] %vm261, %v668
        %714 = vst.msk [vmem:[%s211 + $0x10] sm:$0xff] %vm261, %v671
        %715 = vst.msk [vmem:[%s211 + $0x18] sm:$0xff] %vm261, %v674
        %716 = vst.msk [vmem:[%s211 + $0x20] sm:$0xff] %vm261, %v677
        %717 = vst.msk [vmem:[%s211 + $0x28] sm:$0xff] %vm261, %v680
        %718 = vst.msk [vmem:[%s211 + $0x30] sm:$0xff] %vm261, %v683
        %719 = vst.msk [vmem:[%s211 + $0x38] sm:$0xff] %vm261, %v686
        %720 = vst.msk [vmem:[%s211 + $0x40] sm:$0xff] %vm261, %v689
        %721 = vst.msk [vmem:[%s211 + $0x48] sm:$0xff] %vm261, %v692
        %722 = vst.msk [vmem:[%s211 + $0x50] sm:$0xff] %vm261, %v695
        %723 = vst.msk [vmem:[%s211 + $0x58] sm:$0xff] %vm261, %v698
        %724 = vst.msk [vmem:[%s211 + $0x60] sm:$0xff] %vm261, %v701
        %725 = vst.msk [vmem:[%s211 + $0x68] sm:$0xff] %vm261, %v704
        %726 = vst.msk [vmem:[%s211 + $0x70] sm:$0xff] %vm261, %v707
        %727 = vst.msk [vmem:[%s211 + $0x78] sm:$0xff] %vm261, %v710
        %s728 = sand.u32 %s95, 1
        %s729 = scalar_lea.sflag [#allocation3], %s728
        %s730 = sand.u32 %s95, 1
        %s731 = smul.addr %s730, 128
        %s732 = scalar_lea.vmem [#allocation2], %s731
        %s733 = smul.u32 16, %s19
        %p734 = scmp.lt.s32.totalorder %s733, 31
        %s735 = scalar_select %p734, %s733, 31
        %s736 = smul.addr %s735, 8
        %s737 = scalar_lea.vmem %s4, %s736
        // Predicated region
        $region33: #{tpu_custom_call.1} parent=31 // pred_check
          %p738 = pneg %p105
        $region34: #{tpu_custom_call.1} parent=31 // pred_check_branch
          %740 = sbr.rel (%p738) target = $region36
        $region35: #{tpu_custom_call.1} parent=31 // pred_region
          %s741 = smul.u32 16, %s19
          %743 = vsyncadd %s729, 0
          %s744 = smul.addr %s741, 8
          %s745 = scalar_lea.hbm %s3, %s744
          %s746 = sshll.u32 %s732, 4
          %s747 = int_to_ptr.vmem [resolvable:$true] %s746
          %s748 = sshll.u32 %s745, 4
          %s749 = int_to_ptr.hbm [resolvable:$true] %s748
          %754 = dma.vmem_to_hbm [thread:$0]  %s747, 2048, %s749, %s729, 128, 128, 8
        $region36: #{tpu_custom_call.1} parent=31 // pred_fallthru
          _
        // Predicated region
        $region37: #{tpu_custom_call.1} parent=31 // pred_check
          %p755 = pneg %p131
        $region38: #{tpu_custom_call.1} parent=31 // pred_check_branch
          %757 = sbr.rel (%p755) target = $region40
        $region39: #{tpu_custom_call.1} parent=31 // pred_region
          %s758 = smul.u32 16, %s19
        $region40: #{tpu_custom_call.1} parent=31 // pred_fallthru
          _
      $region32: #{tpu_custom_call.1} parent=5 // pred_fallthru
        _
      %p759 = scmp.le.s32.totalorder 2, %s14
      // Predicated region
      $region41: #{tpu_custom_call.1} parent=5 // pred_check
        %p760 = pneg %p759
      $region42: #{tpu_custom_call.1} parent=5 // pred_check_branch
        %762 = sbr.rel (%p760) target = $region44
      $region43: #{tpu_custom_call.1} parent=5 // pred_region
        %s763 = ssub.s32 %s14, 2
        // Predicated region
        $region45: #{tpu_custom_call.1} parent=43 // pred_check
          %p764 = pneg %p111
        $region46: #{tpu_custom_call.1} parent=43 // pred_check_branch
          %766 = sbr.rel (%p764) target = $region48
        $region47: #{tpu_custom_call.1} parent=43 // pred_region
          %s767 = sand.u32 %s96, 1
          %s768 = scalar_lea.sflag [#allocation3], %s767
          %s769 = sand.u32 %s96, 1
          %s770 = smul.addr %s769, 128
          %s771 = scalar_lea.vmem [#allocation2], %s770
          %773 = dma.done %s768, 2048
        $region48: #{tpu_custom_call.1} parent=43 // pred_fallthru
          _
        // Predicated region
        $region49: #{tpu_custom_call.1} parent=43 // pred_check
          %p774 = pneg %p137
        $region50: #{tpu_custom_call.1} parent=43 // pred_check_branch
          %776 = sbr.rel (%p774) target = $region52
        $region51: #{tpu_custom_call.1} parent=43 // pred_region
          %s777 = smul.u32 16, %s20
          %p778 = scmp.lt.s32.totalorder %s777, 31
          %s779 = scalar_select %p778, %s777, 31
          %s780 = smul.addr %s779, 8
          %s781 = scalar_lea.vmem %s4, %s780
        $region52: #{tpu_custom_call.1} parent=43 // pred_fallthru
          _
      $region44: #{tpu_custom_call.1} parent=5 // pred_fallthru
        _
    $region6: #{tpu_custom_call.1} parent=1 // loop_footer
      %s18 = sadd.s32 1, %s14
    $region7: #{tpu_custom_call.1} parent=1 // loop_footer_branch
      %13 = sbr.rel target = $region3
    $region8: #{tpu_custom_call.1} parent=1 // loop_exit
      _
    %782 = vsyncpa [#allocation3], 1
    %s783 = scalar_lea.sflag [#allocation3], 1
    %784 = vsyncpa %s783, 1

</llo_original>
